<compile_context>
chip_gen: v6e
topology: v6e:2x2x1
jax: 0.10.0
libtpu: 0.0.40
codegen_flags: <defaults>
</compile_context>

<pallas_src>
import functools

import jax
import jax.numpy as jnp
from jax import lax
from jax.experimental import pallas as pl
from jax.experimental.pallas import tpu as pltpu

EPS = 1e-5  # nn.InstanceNorm2d default eps


def _conv3x3_instnorm(slab, w_ref, im2col_ref, masks, H, W, CP, relu):
    """3x3 reflect conv (bias-free) + InstanceNorm2d(no affine) [+ ReLU].

    slab:       (C, H*W) f32 values (lane-dense spatial plane)
    w_ref:      (C, 9*CP) VMEM ref, flat im2col weight (zero in pad columns)
    im2col_ref: (9*CP, H*W) f32 VMEM scratch
    """
    C, HW = slab.shape
    w0, wl, h0, hl = masks  # (C, HW) bools: w==0, w==W-1, h==0, h==H-1

    def lane_roll(x, k):
        # np.roll semantics along lanes: out[..., i] = x[..., (i - k) % HW]
        return pltpu.roll(x, k % HW, axis=1)

    # Column (W) shifts with reflection at the w boundaries (kw = 0, 1, 2).
    prev_w = lane_roll(slab, 1)        # reads x[h, w-1] (wraps at w==0)
    next_w = lane_roll(slab, HW - 1)   # reads x[h, w+1] (wraps at w==W-1)
    col = (
        jnp.where(w0, next_w, prev_w),   # kw=0: x[w-1]; w==0 reflects to x[1]
        slab,                            # kw=1
        jnp.where(wl, prev_w, next_w),   # kw=2: x[w+1]; w==W-1 reflects to x[W-2]
    )

    # Build im2col lazily: compute one tap, store it at its 8-aligned row block,
    # drop it.  Row block for tap (kh, kw) starts at (kh*3 + kw) * CP.
    for kw in range(3):
        c = col[kw]
        prev_h = lane_roll(c, W)        # reads row h-1 (wraps at h==0)
        next_h = lane_roll(c, HW - W)   # reads row h+1 (wraps at h==H-1)
        im2col_ref[(0 * 3 + kw) * CP:(0 * 3 + kw) * CP + C, :] = (
            jnp.where(h0, next_h, prev_h))                      # kh=0 (dh=-1)
        im2col_ref[(1 * 3 + kw) * CP:(1 * 3 + kw) * CP + C, :] = c  # kh=1
        im2col_ref[(2 * 3 + kw) * CP:(2 * 3 + kw) * CP + C, :] = (
            jnp.where(hl, prev_h, next_h))                      # kh=2 (dh=+1)

    # One MXU matmul does all channel mixing: (C, 9*CP) x (9*CP, HW).
    acc = jnp.dot(w_ref[...], im2col_ref[...],
                  preferred_element_type=jnp.float32)

    # InstanceNorm2d: biased variance, no affine.  Two-pass (mean, then
    # centered sum of squares) for better precision at the same op count.
    inv_hw = 1.0 / float(HW)
    mean = jnp.sum(acc, axis=1, keepdims=True) * inv_hw
    centered = acc - mean
    var = jnp.sum(centered * centered, axis=1, keepdims=True) * inv_hw
    y = centered * lax.rsqrt(var + EPS)
    if relu:
        y = jnp.maximum(y, 0.0)
    return y


def _res_block_kernel(H, W, CP, x_ref, mask_ref, w1_ref, w2_ref, out_ref,
                      im2col_ref):
    """Fused ResBlock for one batch element. x/out refs are (C, H*W)."""
    C, HW = x_ref.shape
    x = x_ref[...].astype(jnp.float32)

    # Zero the scratch so the CP-padding rows are finite (their weight columns
    # are zero, but 0 * NaN would poison the dot).  No-op cost at these sizes.
    if CP != C:
        im2col_ref[...] = jnp.zeros_like(im2col_ref)

    # Boundary masks: precomputed batch-invariant (4, HW) f32 input.
    mf = mask_ref[...]

    def mask_row(i):
        return jnp.broadcast_to(mf[i:i + 1, :], (C, HW)) > 0.5

    masks = (mask_row(0), mask_row(1), mask_row(2), mask_row(3))

    y1 = _conv3x3_instnorm(x, w1_ref, im2col_ref, masks, H, W, CP, relu=True)
    y2 = _conv3x3_instnorm(y1, w2_ref, im2col_ref, masks, H, W, CP, relu=False)
    out_ref[...] = (x + y2).astype(out_ref.dtype)               # residual add


def res_block(x, params):
    """Pallas implementation of ResBlock.forward: x + res(x)."""
    N, C, H, W = x.shape
    w1, b1, w2, b2 = params
    del b1, b2  # conv bias cancels exactly under InstanceNorm mean subtraction
    HW = H * W
    CP = ((C + 7) // 8) * 8  # per-tap row block, 8-sublane aligned

    # Lane-dense layouts (pure reshapes/transposes, done once outside the kernel).
    x2 = x.reshape(N, C, HW)

    def flat_w(w):
        # w_flat[co, (kh*3+kw)*CP + ci] = w[co, ci, kh, kw]; zero pad columns.
        wt = jnp.transpose(w, (0, 2, 3, 1))                    # (C, 3, 3, C)
        wt = jnp.pad(wt, ((0, 0), (0, 0), (0, 0), (0, CP - C)))
        return wt.reshape(C, 9 * CP).astype(jnp.float32)

    w1f = flat_w(w1)
    w2f = flat_w(w2)

    # Batch-invariant boundary masks, precomputed once: rows are
    # [w==0, w==W-1, h==0, h==H-1] over the flattened H*W lane axis.
    lane = jnp.arange(HW, dtype=jnp.int32)
    wpos = lane % W
    hpos = lane // W
    masks = jnp.stack(
        [wpos == 0, wpos == W - 1, hpos == 0, hpos == H - 1]
    ).astype(jnp.float32)                                       # (4, HW)

    kernel = functools.partial(_res_block_kernel, H, W, CP)
    out = pl.pallas_call(
        kernel,
        out_shape=jax.ShapeDtypeStruct((N, C, HW), x.dtype),
        grid=(N,),
        in_specs=[
            pl.BlockSpec((None, C, HW), lambda n: (n, 0, 0)),   # x
            pl.BlockSpec((4, HW), lambda n: (0, 0)),            # masks
            pl.BlockSpec((C, 9 * CP), lambda n: (0, 0)),        # w1 (flat)
            pl.BlockSpec((C, 9 * CP), lambda n: (0, 0)),        # w2 (flat)
        ],
        out_specs=pl.BlockSpec((None, C, HW), lambda n: (n, 0, 0)),
        scratch_shapes=[pltpu.VMEM((9 * CP, HW), jnp.float32)],  # im2col
        compiler_params=pltpu.CompilerParams(
            dimension_semantics=("parallel",)),
    )(x2, masks, w1f, w2f)
    return out.reshape(N, C, H, W)


res_block = jax.jit(res_block)


# ------------------------- pure-JAX reference -------------------------------
def _ref_res_block(x, params):
    w1, b1, w2, b2 = params

    def block(h, w, b, relu):
        hp = jnp.pad(h, ((0, 0), (0, 0), (1, 1), (1, 1)), mode="reflect")
        y = jax.lax.conv_general_dilated(
            hp, w, (1, 1), "VALID",
            dimension_numbers=("NCHW", "OIHW", "NCHW"))
        y = y + b[None, :, None, None]
        m = jnp.mean(y, axis=(2, 3), keepdims=True)
        v = jnp.mean((y - m) ** 2, axis=(2, 3), keepdims=True)
        y = (y - m) * jax.lax.rsqrt(v + EPS)
        return jnp.maximum(y, 0.0) if relu else y

    y1 = block(x, w1, b1, True)
    y2 = block(y1, w2, b2, False)
    return x + y2


if __name__ == "__main__":
    N, C, H, W = 2, 4, 16, 16
    key = jax.random.PRNGKey(0)
    k_x, k_w1, k_b1, k_w2, k_b2 = jax.random.split(key, 5)

    # Deterministic init (PyTorch-style uniform bounds: 1/sqrt(fan_in)).
    fan_in = C * 3 * 3
    bound = 1.0 / float(fan_in) ** 0.5
    x = jax.random.normal(k_x, (N, C, H, W), jnp.float32)
    w1 = jax.random.uniform(k_w1, (C, C, 3, 3), jnp.float32, -bound, bound)
    b1 = jax.random.uniform(k_b1, (C,), jnp.float32, -bound, bound)
    w2 = jax.random.uniform(k_w2, (C, C, 3, 3), jnp.float32, -bound, bound)
    b2 = jax.random.uniform(k_b2, (C,), jnp.float32, -bound, bound)
    params = (w1, b1, w2, b2)

    out = jax.block_until_ready(res_block(x, params))
    ref = _ref_res_block(x, params)

    assert out.shape == (N, C, H, W), out.shape
    assert out.dtype == x.dtype, out.dtype
    err = float(jnp.max(jnp.abs(out - ref)))
    assert jnp.allclose(out, ref, atol=1e-3, rtol=1e-3), err
    print("KERNEL_OK")
</pallas_src>

<mosaic_0001>
module attributes {stable_mosaic.version = 11 : i64} {
  func.func @_res_block_kernel(%arg0: i32, %arg1: memref<1x4x256xf32, #tpu.memory_space<vmem>>, %arg2: memref<4x256xf32, #tpu.memory_space<vmem>>, %arg3: memref<4x72xf32, #tpu.memory_space<vmem>>, %arg4: memref<4x72xf32, #tpu.memory_space<vmem>>, %arg5: memref<1x4x256xf32, #tpu.memory_space<vmem>>, %arg6: memref<72x256xf32, #tpu.memory_space<vmem>>) attributes {dimension_semantics = [#tpu.dimension_semantics<parallel>], iteration_bounds = array<i64: 2>, scalar_prefetch = 0 : i64, scratch_operands = 1 : i64, tpu.core_type = #tpu.core_type<tc>, window_params = [{transform_indices = @transform_0, window_bounds = array<i64: 1, 4, 256>}, {pipeline_mode = #tpu.pipeline_mode<synchronous>, transform_indices = @transform_1, window_bounds = array<i64: 4, 256>}, {pipeline_mode = #tpu.pipeline_mode<synchronous>, transform_indices = @transform_2, window_bounds = array<i64: 4, 72>}, {pipeline_mode = #tpu.pipeline_mode<synchronous>, transform_indices = @transform_3, window_bounds = array<i64: 4, 72>}, {transform_indices = @transform_4, window_bounds = array<i64: 1, 4, 256>}]} {
    %c0 = arith.constant 0 : index
    %c0_0 = arith.constant 0 : index
    %c0_1 = arith.constant 0 : index
    %0 = vector.load %arg1[%c0, %c0_0, %c0_1] : memref<1x4x256xf32, #tpu.memory_space<vmem>>, vector<1x4x256xf32>
    %1 = vector.shape_cast %0 : vector<1x4x256xf32> to vector<4x256xf32>
    %cst = arith.constant 0.000000e+00 : f32
    %2 = vector.broadcast %cst : f32 to vector<72x256xf32>
    %c0_2 = arith.constant 0 : index
    %c0_3 = arith.constant 0 : index
    %3 = vector.load %arg6[%c0_2, %c0_3] : memref<72x256xf32, #tpu.memory_space<vmem>>, vector<72x256xf32>
    tpu.vector_store %arg6[%c0_2, %c0_3], %2 {strides = array<i32>} : memref<72x256xf32, #tpu.memory_space<vmem>>, vector<72x256xf32>,
    %c0_4 = arith.constant 0 : index
    %c0_5 = arith.constant 0 : index
    %4 = vector.load %arg2[%c0_4, %c0_5] : memref<4x256xf32, #tpu.memory_space<vmem>>, vector<4x256xf32>
    %5 = vector.extract_strided_slice %4 {offsets = [0, 0], sizes = [1, 256], strides = [1, 1]} : vector<4x256xf32> to vector<1x256xf32>
    %6 = vector.shape_cast %5 : vector<1x256xf32> to vector<1x256xf32>
    %7 = vector.broadcast %6 : vector<1x256xf32> to vector<4x256xf32>
    %cst_6 = arith.constant 5.000000e-01 : f32
    %8 = vector.broadcast %cst_6 : f32 to vector<4x256xf32>
    %9 = arith.cmpf ogt, %7, %8 : vector<4x256xf32>
    %10 = vector.extract_strided_slice %4 {offsets = [1, 0], sizes = [1, 256], strides = [1, 1]} : vector<4x256xf32> to vector<1x256xf32>
    %11 = vector.shape_cast %10 : vector<1x256xf32> to vector<1x256xf32>
    %12 = vector.broadcast %11 : vector<1x256xf32> to vector<4x256xf32>
    %cst_7 = arith.constant 5.000000e-01 : f32
    %13 = vector.broadcast %cst_7 : f32 to vector<4x256xf32>
    %14 = arith.cmpf ogt, %12, %13 : vector<4x256xf32>
    %15 = vector.extract_strided_slice %4 {offsets = [2, 0], sizes = [1, 256], strides = [1, 1]} : vector<4x256xf32> to vector<1x256xf32>
    %16 = vector.shape_cast %15 : vector<1x256xf32> to vector<1x256xf32>
    %17 = vector.broadcast %16 : vector<1x256xf32> to vector<4x256xf32>
    %cst_8 = arith.constant 5.000000e-01 : f32
    %18 = vector.broadcast %cst_8 : f32 to vector<4x256xf32>
    %19 = arith.cmpf ogt, %17, %18 : vector<4x256xf32>
    %20 = vector.extract_strided_slice %4 {offsets = [3, 0], sizes = [1, 256], strides = [1, 1]} : vector<4x256xf32> to vector<1x256xf32>
    %21 = vector.shape_cast %20 : vector<1x256xf32> to vector<1x256xf32>
    %22 = vector.broadcast %21 : vector<1x256xf32> to vector<4x256xf32>
    %cst_9 = arith.constant 5.000000e-01 : f32
    %23 = vector.broadcast %cst_9 : f32 to vector<4x256xf32>
    %24 = arith.cmpf ogt, %22, %23 : vector<4x256xf32>
    %c1_i32 = arith.constant 1 : i32
    %25 = tpu.dynamic_rotate %1 by %c1_i32 dim 1 : vector<4x256xf32>, i32 -> vector<4x256xf32>
    %c255_i32 = arith.constant 255 : i32
    %26 = tpu.dynamic_rotate %1 by %c255_i32 dim 1 : vector<4x256xf32>, i32 -> vector<4x256xf32>
    %27 = arith.select %9, %26, %25 : vector<4x256xi1>, vector<4x256xf32>
    %28 = arith.select %14, %25, %26 : vector<4x256xi1>, vector<4x256xf32>
    %c16_i32 = arith.constant 16 : i32
    %29 = tpu.dynamic_rotate %27 by %c16_i32 dim 1 : vector<4x256xf32>, i32 -> vector<4x256xf32>
    %c240_i32 = arith.constant 240 : i32
    %30 = tpu.dynamic_rotate %27 by %c240_i32 dim 1 : vector<4x256xf32>, i32 -> vector<4x256xf32>
    %31 = arith.select %19, %30, %29 : vector<4x256xi1>, vector<4x256xf32>
    %c0_10 = arith.constant 0 : index
    %c0_11 = arith.constant 0 : index
    %32 = vector.load %arg6[%c0_10, %c0_11] : memref<72x256xf32, #tpu.memory_space<vmem>>, vector<4x256xf32>
    tpu.vector_store %arg6[%c0_10, %c0_11], %31 {strides = array<i32>} : memref<72x256xf32, #tpu.memory_space<vmem>>, vector<4x256xf32>,
    %c24 = arith.constant 24 : index
    %c0_12 = arith.constant 0 : index
    %33 = vector.load %arg6[%c24, %c0_12] : memref<72x256xf32, #tpu.memory_space<vmem>>, vector<4x256xf32>
    tpu.vector_store %arg6[%c24, %c0_12], %27 {strides = array<i32>} : memref<72x256xf32, #tpu.memory_space<vmem>>, vector<4x256xf32>,
    %34 = arith.select %24, %29, %30 : vector<4x256xi1>, vector<4x256xf32>
    %c48 = arith.constant 48 : index
    %c0_13 = arith.constant 0 : index
    %35 = vector.load %arg6[%c48, %c0_13] : memref<72x256xf32, #tpu.memory_space<vmem>>, vector<4x256xf32>
    tpu.vector_store %arg6[%c48, %c0_13], %34 {strides = array<i32>} : memref<72x256xf32, #tpu.memory_space<vmem>>, vector<4x256xf32>,
    %c16_i32_14 = arith.constant 16 : i32
    %36 = tpu.dynamic_rotate %1 by %c16_i32_14 dim 1 : vector<4x256xf32>, i32 -> vector<4x256xf32>
    %c240_i32_15 = arith.constant 240 : i32
    %37 = tpu.dynamic_rotate %1 by %c240_i32_15 dim 1 : vector<4x256xf32>, i32 -> vector<4x256xf32>
    %38 = arith.select %19, %37, %36 : vector<4x256xi1>, vector<4x256xf32>
    %c8 = arith.constant 8 : index
    %c0_16 = arith.constant 0 : index
    %39 = vector.load %arg6[%c8, %c0_16] : memref<72x256xf32, #tpu.memory_space<vmem>>, vector<4x256xf32>
    tpu.vector_store %arg6[%c8, %c0_16], %38 {strides = array<i32>} : memref<72x256xf32, #tpu.memory_space<vmem>>, vector<4x256xf32>,
    %c32 = arith.constant 32 : index
    %c0_17 = arith.constant 0 : index
    %40 = vector.load %arg6[%c32, %c0_17] : memref<72x256xf32, #tpu.memory_space<vmem>>, vector<4x256xf32>
    tpu.vector_store %arg6[%c32, %c0_17], %1 {strides = array<i32>} : memref<72x256xf32, #tpu.memory_space<vmem>>, vector<4x256xf32>,
    %41 = arith.select %24, %36, %37 : vector<4x256xi1>, vector<4x256xf32>
    %c56 = arith.constant 56 : index
    %c0_18 = arith.constant 0 : index
    %42 = vector.load %arg6[%c56, %c0_18] : memref<72x256xf32, #tpu.memory_space<vmem>>, vector<4x256xf32>
    tpu.vector_store %arg6[%c56, %c0_18], %41 {strides = array<i32>} : memref<72x256xf32, #tpu.memory_space<vmem>>, vector<4x256xf32>,
    %c16_i32_19 = arith.constant 16 : i32
    %43 = tpu.dynamic_rotate %28 by %c16_i32_19 dim 1 : vector<4x256xf32>, i32 -> vector<4x256xf32>
    %c240_i32_20 = arith.constant 240 : i32
    %44 = tpu.dynamic_rotate %28 by %c240_i32_20 dim 1 : vector<4x256xf32>, i32 -> vector<4x256xf32>
    %45 = arith.select %19, %44, %43 : vector<4x256xi1>, vector<4x256xf32>
    %c16 = arith.constant 16 : index
    %c0_21 = arith.constant 0 : index
    %46 = vector.load %arg6[%c16, %c0_21] : memref<72x256xf32, #tpu.memory_space<vmem>>, vector<4x256xf32>
    tpu.vector_store %arg6[%c16, %c0_21], %45 {strides = array<i32>} : memref<72x256xf32, #tpu.memory_space<vmem>>, vector<4x256xf32>,
    %c40 = arith.constant 40 : index
    %c0_22 = arith.constant 0 : index
    %47 = vector.load %arg6[%c40, %c0_22] : memref<72x256xf32, #tpu.memory_space<vmem>>, vector<4x256xf32>
    tpu.vector_store %arg6[%c40, %c0_22], %28 {strides = array<i32>} : memref<72x256xf32, #tpu.memory_space<vmem>>, vector<4x256xf32>,
    %48 = arith.select %24, %43, %44 : vector<4x256xi1>, vector<4x256xf32>
    %c64 = arith.constant 64 : index
    %c0_23 = arith.constant 0 : index
    %49 = vector.load %arg6[%c64, %c0_23] : memref<72x256xf32, #tpu.memory_space<vmem>>, vector<4x256xf32>
    tpu.vector_store %arg6[%c64, %c0_23], %48 {strides = array<i32>} : memref<72x256xf32, #tpu.memory_space<vmem>>, vector<4x256xf32>,
    %c0_24 = arith.constant 0 : index
    %c0_25 = arith.constant 0 : index
    %50 = vector.load %arg3[%c0_24, %c0_25] : memref<4x72xf32, #tpu.memory_space<vmem>>, vector<4x72xf32>
    %c0_26 = arith.constant 0 : index
    %c0_27 = arith.constant 0 : index
    %51 = vector.load %arg6[%c0_26, %c0_27] : memref<72x256xf32, #tpu.memory_space<vmem>>, vector<72x256xf32>
    %cst_28 = arith.constant dense<0.000000e+00> : vector<4x256xf32>
    %52 = tpu.matmul %50, %51, %cst_28 {dimension_numbers = #tpu.dot_dimension_numbers<[1], [0], [0], [1], [0, 0, 1, 1], [], []>} : vector<4x72xf32>, vector<72x256xf32>, vector<4x256xf32> -> vector<4x256xf32>
    %cst_29 = arith.constant dense<0.000000e+00> : vector<4xf32>
    %53 = vector.multi_reduction <add>, %52, %cst_29 [1] : vector<4x256xf32> to vector<4xf32>
    %54 = vector.shape_cast %53 : vector<4xf32> to vector<4x1xf32>
    %cst_30 = arith.constant 3.906250e-03 : f32
    %55 = vector.broadcast %cst_30 : f32 to vector<4x1xf32>
    %56 = arith.mulf %54, %55 : vector<4x1xf32>
    %57 = vector.broadcast %56 : vector<4x1xf32> to vector<4x256xf32>
    %58 = arith.subf %52, %57 : vector<4x256xf32>
    %59 = arith.mulf %58, %58 : vector<4x256xf32>
    %cst_31 = arith.constant dense<0.000000e+00> : vector<4xf32>
    %60 = vector.multi_reduction <add>, %59, %cst_31 [1] : vector<4x256xf32> to vector<4xf32>
    %61 = vector.shape_cast %60 : vector<4xf32> to vector<4x1xf32>
    %cst_32 = arith.constant 3.906250e-03 : f32
    %62 = vector.broadcast %cst_32 : f32 to vector<4x1xf32>
    %63 = arith.mulf %61, %62 : vector<4x1xf32>
    %cst_33 = arith.constant 9.99999974E-6 : f32
    %64 = vector.broadcast %cst_33 : f32 to vector<4x1xf32>
    %65 = arith.addf %63, %64 : vector<4x1xf32>
    %66 = math.rsqrt %65 : vector<4x1xf32>
    %67 = vector.broadcast %66 : vector<4x1xf32> to vector<4x256xf32>
    %68 = arith.mulf %58, %67 : vector<4x256xf32>
    %cst_34 = arith.constant 0.000000e+00 : f32
    %69 = vector.broadcast %cst_34 : f32 to vector<4x256xf32>
    %70 = arith.maximumf %68, %69 : vector<4x256xf32>
    %c1_i32_35 = arith.constant 1 : i32
    %71 = tpu.dynamic_rotate %70 by %c1_i32_35 dim 1 : vector<4x256xf32>, i32 -> vector<4x256xf32>
    %c255_i32_36 = arith.constant 255 : i32
    %72 = tpu.dynamic_rotate %70 by %c255_i32_36 dim 1 : vector<4x256xf32>, i32 -> vector<4x256xf32>
    %73 = arith.select %9, %72, %71 : vector<4x256xi1>, vector<4x256xf32>
    %74 = arith.select %14, %71, %72 : vector<4x256xi1>, vector<4x256xf32>
    %c16_i32_37 = arith.constant 16 : i32
    %75 = tpu.dynamic_rotate %73 by %c16_i32_37 dim 1 : vector<4x256xf32>, i32 -> vector<4x256xf32>
    %c240_i32_38 = arith.constant 240 : i32
    %76 = tpu.dynamic_rotate %73 by %c240_i32_38 dim 1 : vector<4x256xf32>, i32 -> vector<4x256xf32>
    %77 = arith.select %19, %76, %75 : vector<4x256xi1>, vector<4x256xf32>
    %c0_39 = arith.constant 0 : index
    %c0_40 = arith.constant 0 : index
    %78 = vector.load %arg6[%c0_39, %c0_40] : memref<72x256xf32, #tpu.memory_space<vmem>>, vector<4x256xf32>
    tpu.vector_store %arg6[%c0_39, %c0_40], %77 {strides = array<i32>} : memref<72x256xf32, #tpu.memory_space<vmem>>, vector<4x256xf32>,
    %c24_41 = arith.constant 24 : index
    %c0_42 = arith.constant 0 : index
    %79 = vector.load %arg6[%c24_41, %c0_42] : memref<72x256xf32, #tpu.memory_space<vmem>>, vector<4x256xf32>
    tpu.vector_store %arg6[%c24_41, %c0_42], %73 {strides = array<i32>} : memref<72x256xf32, #tpu.memory_space<vmem>>, vector<4x256xf32>,
    %80 = arith.select %24, %75, %76 : vector<4x256xi1>, vector<4x256xf32>
    %c48_43 = arith.constant 48 : index
    %c0_44 = arith.constant 0 : index
    %81 = vector.load %arg6[%c48_43, %c0_44] : memref<72x256xf32, #tpu.memory_space<vmem>>, vector<4x256xf32>
    tpu.vector_store %arg6[%c48_43, %c0_44], %80 {strides = array<i32>} : memref<72x256xf32, #tpu.memory_space<vmem>>, vector<4x256xf32>,
    %c16_i32_45 = arith.constant 16 : i32
    %82 = tpu.dynamic_rotate %70 by %c16_i32_45 dim 1 : vector<4x256xf32>, i32 -> vector<4x256xf32>
    %c240_i32_46 = arith.constant 240 : i32
    %83 = tpu.dynamic_rotate %70 by %c240_i32_46 dim 1 : vector<4x256xf32>, i32 -> vector<4x256xf32>
    %84 = arith.select %19, %83, %82 : vector<4x256xi1>, vector<4x256xf32>
    %c8_47 = arith.constant 8 : index
    %c0_48 = arith.constant 0 : index
    %85 = vector.load %arg6[%c8_47, %c0_48] : memref<72x256xf32, #tpu.memory_space<vmem>>, vector<4x256xf32>
    tpu.vector_store %arg6[%c8_47, %c0_48], %84 {strides = array<i32>} : memref<72x256xf32, #tpu.memory_space<vmem>>, vector<4x256xf32>,
    %c32_49 = arith.constant 32 : index
    %c0_50 = arith.constant 0 : index
    %86 = vector.load %arg6[%c32_49, %c0_50] : memref<72x256xf32, #tpu.memory_space<vmem>>, vector<4x256xf32>
    tpu.vector_store %arg6[%c32_49, %c0_50], %70 {strides = array<i32>} : memref<72x256xf32, #tpu.memory_space<vmem>>, vector<4x256xf32>,
    %87 = arith.select %24, %82, %83 : vector<4x256xi1>, vector<4x256xf32>
    %c56_51 = arith.constant 56 : index
    %c0_52 = arith.constant 0 : index
    %88 = vector.load %arg6[%c56_51, %c0_52] : memref<72x256xf32, #tpu.memory_space<vmem>>, vector<4x256xf32>
    tpu.vector_store %arg6[%c56_51, %c0_52], %87 {strides = array<i32>} : memref<72x256xf32, #tpu.memory_space<vmem>>, vector<4x256xf32>,
    %c16_i32_53 = arith.constant 16 : i32
    %89 = tpu.dynamic_rotate %74 by %c16_i32_53 dim 1 : vector<4x256xf32>, i32 -> vector<4x256xf32>
    %c240_i32_54 = arith.constant 240 : i32
    %90 = tpu.dynamic_rotate %74 by %c240_i32_54 dim 1 : vector<4x256xf32>, i32 -> vector<4x256xf32>
    %91 = arith.select %19, %90, %89 : vector<4x256xi1>, vector<4x256xf32>
    %c16_55 = arith.constant 16 : index
    %c0_56 = arith.constant 0 : index
    %92 = vector.load %arg6[%c16_55, %c0_56] : memref<72x256xf32, #tpu.memory_space<vmem>>, vector<4x256xf32>
    tpu.vector_store %arg6[%c16_55, %c0_56], %91 {strides = array<i32>} : memref<72x256xf32, #tpu.memory_space<vmem>>, vector<4x256xf32>,
    %c40_57 = arith.constant 40 : index
    %c0_58 = arith.constant 0 : index
    %93 = vector.load %arg6[%c40_57, %c0_58] : memref<72x256xf32, #tpu.memory_space<vmem>>, vector<4x256xf32>
    tpu.vector_store %arg6[%c40_57, %c0_58], %74 {strides = array<i32>} : memref<72x256xf32, #tpu.memory_space<vmem>>, vector<4x256xf32>,
    %94 = arith.select %24, %89, %90 : vector<4x256xi1>, vector<4x256xf32>
    %c64_59 = arith.constant 64 : index
    %c0_60 = arith.constant 0 : index
    %95 = vector.load %arg6[%c64_59, %c0_60] : memref<72x256xf32, #tpu.memory_space<vmem>>, vector<4x256xf32>
    tpu.vector_store %arg6[%c64_59, %c0_60], %94 {strides = array<i32>} : memref<72x256xf32, #tpu.memory_space<vmem>>, vector<4x256xf32>,
    %c0_61 = arith.constant 0 : index
    %c0_62 = arith.constant 0 : index
    %96 = vector.load %arg4[%c0_61, %c0_62] : memref<4x72xf32, #tpu.memory_space<vmem>>, vector<4x72xf32>
    %c0_63 = arith.constant 0 : index
    %c0_64 = arith.constant 0 : index
    %97 = vector.load %arg6[%c0_63, %c0_64] : memref<72x256xf32, #tpu.memory_space<vmem>>, vector<72x256xf32>
    %cst_65 = arith.constant dense<0.000000e+00> : vector<4x256xf32>
    %98 = tpu.matmul %96, %97, %cst_65 {dimension_numbers = #tpu.dot_dimension_numbers<[1], [0], [0], [1], [0, 0, 1, 1], [], []>} : vector<4x72xf32>, vector<72x256xf32>, vector<4x256xf32> -> vector<4x256xf32>
    %cst_66 = arith.constant dense<0.000000e+00> : vector<4xf32>
    %99 = vector.multi_reduction <add>, %98, %cst_66 [1] : vector<4x256xf32> to vector<4xf32>
    %100 = vector.shape_cast %99 : vector<4xf32> to vector<4x1xf32>
    %cst_67 = arith.constant 3.906250e-03 : f32
    %101 = vector.broadcast %cst_67 : f32 to vector<4x1xf32>
    %102 = arith.mulf %100, %101 : vector<4x1xf32>
    %103 = vector.broadcast %102 : vector<4x1xf32> to vector<4x256xf32>
    %104 = arith.subf %98, %103 : vector<4x256xf32>
    %105 = arith.mulf %104, %104 : vector<4x256xf32>
    %cst_68 = arith.constant dense<0.000000e+00> : vector<4xf32>
    %106 = vector.multi_reduction <add>, %105, %cst_68 [1] : vector<4x256xf32> to vector<4xf32>
    %107 = vector.shape_cast %106 : vector<4xf32> to vector<4x1xf32>
    %cst_69 = arith.constant 3.906250e-03 : f32
    %108 = vector.broadcast %cst_69 : f32 to vector<4x1xf32>
    %109 = arith.mulf %107, %108 : vector<4x1xf32>
    %cst_70 = arith.constant 9.99999974E-6 : f32
    %110 = vector.broadcast %cst_70 : f32 to vector<4x1xf32>
    %111 = arith.addf %109, %110 : vector<4x1xf32>
    %112 = math.rsqrt %111 : vector<4x1xf32>
    %113 = vector.broadcast %112 : vector<4x1xf32> to vector<4x256xf32>
    %114 = arith.mulf %104, %113 : vector<4x256xf32>
    %115 = arith.addf %1, %114 : vector<4x256xf32>
    %c0_71 = arith.constant 0 : index
    %c0_72 = arith.constant 0 : index
    %c0_73 = arith.constant 0 : index
    %116 = vector.load %arg5[%c0_71, %c0_72, %c0_73] : memref<1x4x256xf32, #tpu.memory_space<vmem>>, vector<1x4x256xf32>
    %117 = vector.shape_cast %116 : vector<1x4x256xf32> to vector<4x256xf32>
    %118 = vector.shape_cast %115 : vector<4x256xf32> to vector<1x4x256xf32>
    tpu.vector_store %arg5[%c0_71, %c0_72, %c0_73], %118 {strides = array<i32>} : memref<1x4x256xf32, #tpu.memory_space<vmem>>, vector<1x4x256xf32>,
    return
  }
  func.func @transform_0(%arg0: i32) -> (i32, i32, i32) {
    %c0_i32 = arith.constant 0 : i32
    %c0_i32_0 = arith.constant 0 : i32
    %c0_i32_1 = arith.constant 0 : i32
    return %arg0, %c0_i32, %c0_i32_0 : i32, i32, i32
  }
  func.func @transform_1(%arg0: i32) -> (i32, i32) {
    %c0_i32 = arith.constant 0 : i32
    %c0_i32_0 = arith.constant 0 : i32
    %c0_i32_1 = arith.constant 0 : i32
    return %c0_i32, %c0_i32_0 : i32, i32
  }
  func.func @transform_2(%arg0: i32) -> (i32, i32) {
    %c0_i32 = arith.constant 0 : i32
    %c0_i32_0 = arith.constant 0 : i32
    %c0_i32_1 = arith.constant 0 : i32
    return %c0_i32, %c0_i32_0 : i32, i32
  }
  func.func @transform_3(%arg0: i32) -> (i32, i32) {
    %c0_i32 = arith.constant 0 : i32
    %c0_i32_0 = arith.constant 0 : i32
    %c0_i32_1 = arith.constant 0 : i32
    return %c0_i32, %c0_i32_0 : i32, i32
  }
  func.func @transform_4(%arg0: i32) -> (i32, i32, i32) {
    %c0_i32 = arith.constant 0 : i32
    %c0_i32_0 = arith.constant 0 : i32
    %c0_i32_1 = arith.constant 0 : i32
    return %arg0, %c0_i32, %c0_i32_0 : i32, i32, i32
  }
}

</mosaic_0001>

<llo_original>
// kernel: res_block.1
$region0: #{res_block.1}
  #allocation0 [shape = 'u32[]', space=smem, size = 0x4, offset = 0x4, fixed_abs, tag = 'smem constant byte address 0x4 - core index']
  #allocation1 [shape = 'u32[144,128]{1,0:T(1,128)}', space=vmem, size = 0x12000, scoped, tag = 'internal scratch']
  #allocation2 [shape = 'f32[72,256]{1,0:T(8,128)}', space=vmem, size = 0x12000, scoped, tag = 'scratch operand']
  %s0 = inlined_call_operand.vmem [shape: f32[2,4,256], index: 0, kind: input, shape index: {}]
  %s1 = inlined_call_operand.vmem [shape: f32[4,256], index: 1, kind: input, shape index: {}]
  %s2 = inlined_call_operand.vmem [shape: f32[4,72], index: 2, kind: input, shape index: {}]
  %s3 = inlined_call_operand.vmem [shape: f32[4,72], index: 3, kind: input, shape index: {}]
  %s4 = inlined_call_operand.vmem [shape: f32[2,4,256], index: 4, kind: output, shape index: {}]
  %s5 = sld [smem:[#allocation0]]
  $region49: #{res_block.1} parent=0
    _
  %s7 = ssub.s32 1, %s5
  %s8 = scalar_select 0, %s7, %s5
  loop: start=0, step=1, limit=4
  $region2: #{res_block.1} parent=0 // loop_pre_header
    _
  $region3: #{res_block.1} parent=0 // loop_header
    %s10 = sphi 0, %s14
    %p11 = scmp.ge.s32.totalorder %s10, 4
    %s20 = sphi 0, %s22
    %s23 = sphi 0, %s20
    %s24 = sphi 0, %s23
    %s40 = sphi 0, %s24
    %s44 = sphi 0, %s44
    %s46 = sphi 0, %s44
    %s47 = sphi 0, %s46
    %s61 = sphi 0, %s47
    %s65 = sphi 0, %s65
    %s67 = sphi 0, %s65
    %s68 = sphi 0, %s67
    %s82 = sphi 0, %s68
    %s86 = sphi 0, %s86
    %s88 = sphi 0, %s86
    %s89 = sphi 0, %s88
    %s103 = sphi 0, %s89
    %s109 = sphi 0, %s111
    %s112 = sphi 0, %s109
    %s113 = sphi 0, %s112
    %s129 = sphi 0, %s113
  $region4: #{res_block.1} parent=0 // loop_header_branch
    %13 = sbr.rel (%p11) target = $region8
  $region5: #{res_block.1} parent=0 // loop_body
    %s15 = ssub.s32 %s10, 1
    %s16 = ssub.s32 %s10, 2
    %s17 = sadd.s32 %s10, 1
    %s18 = ssub.s32 %s10, %s17
    %p19 = scmp.eq.s32.totalorder %s18, 0
    %s21 = sadd.s32 %s20, 1
    %s22 = scalar_select %p19, %s20, %s21
    %p25 = pneg %p19
    %p26 = scmp.eq.s32.totalorder %s10, 1
    %p27 = por %p25, %p26
    %p28 = scmp.ne.s32.totalorder %s20, %s23
    %p29 = scmp.eq.s32.totalorder %s10, 0
    %p30 = por %p28, %p29
    %p31 = scmp.ne.s32.totalorder %s20, %s23
    %p32 = scmp.eq.s32.totalorder %s15, 1
    %p33 = por %p31, %p32
    %p34 = scmp.ne.s32.totalorder %s23, %s24
    %p35 = scmp.eq.s32.totalorder %s15, 0
    %p36 = por %p34, %p35
    %p37 = scmp.ne.s32.totalorder %s23, %s24
    %p38 = scmp.eq.s32.totalorder %s16, 1
    %p39 = por %p37, %p38
    %p41 = scmp.ne.s32.totalorder %s24, %s40
    %p42 = scmp.eq.s32.totalorder %s16, 0
    %p43 = por %p41, %p42
    %s45 = sadd.s32 %s44, 1
    %p48 = scmp.eq.s32.totalorder %s10, 1
    %p49 = scmp.ne.s32.totalorder %s44, %s46
    %p50 = scmp.eq.s32.totalorder %s10, 0
    %p51 = por %p49, %p50
    %p52 = scmp.ne.s32.totalorder %s44, %s46
    %p53 = scmp.eq.s32.totalorder %s15, 1
    %p54 = por %p52, %p53
    %p55 = scmp.ne.s32.totalorder %s46, %s47
    %p56 = scmp.eq.s32.totalorder %s15, 0
    %p57 = por %p55, %p56
    %p58 = scmp.ne.s32.totalorder %s46, %s47
    %p59 = scmp.eq.s32.totalorder %s16, 1
    %p60 = por %p58, %p59
    %p62 = scmp.ne.s32.totalorder %s47, %s61
    %p63 = scmp.eq.s32.totalorder %s16, 0
    %p64 = por %p62, %p63
    %s66 = sadd.s32 %s65, 1
    %p69 = scmp.eq.s32.totalorder %s10, 1
    %p70 = scmp.ne.s32.totalorder %s65, %s67
    %p71 = scmp.eq.s32.totalorder %s10, 0
    %p72 = por %p70, %p71
    %p73 = scmp.ne.s32.totalorder %s65, %s67
    %p74 = scmp.eq.s32.totalorder %s15, 1
    %p75 = por %p73, %p74
    %p76 = scmp.ne.s32.totalorder %s67, %s68
    %p77 = scmp.eq.s32.totalorder %s15, 0
    %p78 = por %p76, %p77
    %p79 = scmp.ne.s32.totalorder %s67, %s68
    %p80 = scmp.eq.s32.totalorder %s16, 1
    %p81 = por %p79, %p80
    %p83 = scmp.ne.s32.totalorder %s68, %s82
    %p84 = scmp.eq.s32.totalorder %s16, 0
    %p85 = por %p83, %p84
    %s87 = sadd.s32 %s86, 1
    %p90 = scmp.eq.s32.totalorder %s10, 1
    %p91 = scmp.ne.s32.totalorder %s86, %s88
    %p92 = scmp.eq.s32.totalorder %s10, 0
    %p93 = por %p91, %p92
    %p94 = scmp.ne.s32.totalorder %s86, %s88
    %p95 = scmp.eq.s32.totalorder %s15, 1
    %p96 = por %p94, %p95
    %p97 = scmp.ne.s32.totalorder %s88, %s89
    %p98 = scmp.eq.s32.totalorder %s15, 0
    %p99 = por %p97, %p98
    %p100 = scmp.ne.s32.totalorder %s88, %s89
    %p101 = scmp.eq.s32.totalorder %s16, 1
    %p102 = por %p100, %p101
    %p104 = scmp.ne.s32.totalorder %s89, %s103
    %p105 = scmp.eq.s32.totalorder %s16, 0
    %p106 = por %p104, %p105
    %s107 = ssub.s32 %s10, %s17
    %p108 = scmp.eq.s32.totalorder %s107, 0
    %s110 = sadd.s32 %s109, 1
    %s111 = scalar_select %p108, %s109, %s110
    %p114 = pneg %p108
    %p115 = scmp.eq.s32.totalorder %s10, 1
    %p116 = por %p114, %p115
    %p117 = scmp.ne.s32.totalorder %s109, %s112
    %p118 = scmp.eq.s32.totalorder %s10, 0
    %p119 = por %p117, %p118
    %p120 = scmp.ne.s32.totalorder %s109, %s112
    %p121 = scmp.eq.s32.totalorder %s15, 1
    %p122 = por %p120, %p121
    %p123 = scmp.ne.s32.totalorder %s112, %s113
    %p124 = scmp.eq.s32.totalorder %s15, 0
    %p125 = por %p123, %p124
    %p126 = scmp.ne.s32.totalorder %s112, %s113
    %p127 = scmp.eq.s32.totalorder %s16, 1
    %p128 = por %p126, %p127
    %p130 = scmp.ne.s32.totalorder %s113, %s129
    %p131 = scmp.eq.s32.totalorder %s16, 0
    %p132 = por %p130, %p131
    %p133 = scmp.le.s32.totalorder 1, %s10
    %p134 = scmp.lt.s32.totalorder %s10, 3
    %p135 = pnand %p133, %p134
    %p136 = pneg %p135
    // Predicated region
    $region9: #{res_block.1} parent=5 // pred_check
      _
    $region10: #{res_block.1} parent=5 // pred_check_branch
      %138 = sbr.rel (%p135) target = $region12
    $region11: #{res_block.1} parent=5 // pred_region
      %s139 = ssub.s32 %s10, 1
      // Predicated region
      $region13: #{res_block.1} parent=11 // pred_check
        %p140 = pneg %p57
      $region14: #{res_block.1} parent=11 // pred_check_branch
        %142 = sbr.rel (%p140) target = $region16
      $region15: #{res_block.1} parent=11 // pred_region
        _
      $region16: #{res_block.1} parent=11 // pred_fallthru
        _
      // Predicated region
      $region17: #{res_block.1} parent=11 // pred_check
        %p143 = pneg %p78
      $region18: #{res_block.1} parent=11 // pred_check_branch
        %145 = sbr.rel (%p143) target = $region20
      $region19: #{res_block.1} parent=11 // pred_region
        _
      $region20: #{res_block.1} parent=11 // pred_fallthru
        _
      // Predicated region
      $region21: #{res_block.1} parent=11 // pred_check
        %p146 = pneg %p99
      $region22: #{res_block.1} parent=11 // pred_check_branch
        %148 = sbr.rel (%p146) target = $region24
      $region23: #{res_block.1} parent=11 // pred_region
        _
      $region24: #{res_block.1} parent=11 // pred_fallthru
        _
    $region12: #{res_block.1} parent=5 // pred_fallthru
      _
    %p149 = scmp.lt.s32.totalorder %s10, 2
    // Predicated region
    $region25: #{res_block.1} parent=5 // pred_check
      %p150 = pneg %p149
    $region26: #{res_block.1} parent=5 // pred_check_branch
      %152 = sbr.rel (%p150) target = $region28
    $region27: #{res_block.1} parent=5 // pred_region
      // Predicated region
      $region29: #{res_block.1} parent=27 // pred_check
        %p153 = pneg %p30
      $region30: #{res_block.1} parent=27 // pred_check_branch
        %155 = sbr.rel (%p153) target = $region32
      $region31: #{res_block.1} parent=27 // pred_region
        %p156 = scmp.lt.s32.totalorder %s10, 1
        %s157 = scalar_select %p156, %s10, 1
        %s158 = smul.addr %s157, 2
        %s159 = smul.addr %s158, 4
        %s160 = scalar_lea.vmem %s0, %s159
      $region32: #{res_block.1} parent=27 // pred_fallthru
        _
    $region28: #{res_block.1} parent=5 // pred_fallthru
      _
    %p161 = scmp.le.s32.totalorder 1, %s10
    %p162 = scmp.lt.s32.totalorder %s10, 3
    %p163 = pnand %p161, %p162
    %p164 = pneg %p163
    // Predicated region
    $region33: #{res_block.1} parent=5 // pred_check
      _
    $region34: #{res_block.1} parent=5 // pred_check_branch
      %166 = sbr.rel (%p163) target = $region36
    $region35: #{res_block.1} parent=5 // pred_region
      %s167 = ssub.s32 %s10, 1
      %p168 = scmp.lt.s32.totalorder %s15, 1
      %s169 = scalar_select %p168, %s15, 1
      %s170 = smul.addr %s169, 2
      %s171 = smul.addr %s170, 4
      %s172 = scalar_lea.vmem %s0, %s171
      %p173 = pneg %p36
      %p174 = pneg %p33
      %p175 = pneg %p57
      %p176 = pneg %p54
      %p177 = pneg %p78
      %p178 = pneg %p75
      %p179 = pneg %p99
      %p180 = pneg %p96
      %p181 = pneg %p125
      %p182 = pneg %p122
      %p183 = scmp.lt.s32.totalorder %s15, 1
      %s184 = scalar_select %p183, %s15, 1
      %s185 = smul.addr %s184, 2
      %s186 = smul.addr %s185, 4
      %s187 = scalar_lea.vmem %s4, %s186
      %p188 = scmp.lt.s32.totalorder %s15, 1
      %s189 = scalar_select %p188, %s15, 1
      %s190 = smul.addr %s189, 2
      %s191 = smul.addr %s190, 4
      %s192 = scalar_lea.vmem %s0, %s191
      %p193 = scmp.lt.s32.totalorder %s15, 1
      %s194 = scalar_select %p193, %s15, 1
      %s195 = smul.addr %s194, 2
      %s196 = smul.addr %s195, 4
      %s197 = scalar_lea.vmem %s4, %s196
      %v198 = vld [vmem:[%s192] sm:$0xff]
      %199 = vst [vmem:[#allocation2] sm:$0xff] 0.0
      %200 = vst [vmem:[#allocation2 + $0x8] sm:$0xff] 0.0
      %201 = vst [vmem:[#allocation2 + $0x10] sm:$0xff] 0.0
      %202 = vst [vmem:[#allocation2 + $0x18] sm:$0xff] 0.0
      %203 = vst [vmem:[#allocation2 + $0x20] sm:$0xff] 0.0
      %204 = vst [vmem:[#allocation2 + $0x28] sm:$0xff] 0.0
      %205 = vst [vmem:[#allocation2 + $0x30] sm:$0xff] 0.0
      %206 = vst [vmem:[#allocation2 + $0x38] sm:$0xff] 0.0
      %207 = vst [vmem:[#allocation2 + $0x40] sm:$0xff] 0.0
      %208 = vst [vmem:[#allocation2 + $0x48] sm:$0xff] 0.0
      %209 = vst [vmem:[#allocation2 + $0x50] sm:$0xff] 0.0
      %210 = vst [vmem:[#allocation2 + $0x58] sm:$0xff] 0.0
      %211 = vst [vmem:[#allocation2 + $0x60] sm:$0xff] 0.0
      %212 = vst [vmem:[#allocation2 + $0x68] sm:$0xff] 0.0
      %213 = vst [vmem:[#allocation2 + $0x70] sm:$0xff] 0.0
      %214 = vst [vmem:[#allocation2 + $0x78] sm:$0xff] 0.0
      %215 = vst [vmem:[#allocation2 + $0x80] sm:$0xff] 0.0
      %216 = vst [vmem:[#allocation2 + $0x88] sm:$0xff] 0.0
      %v217 = vld [vmem:[%s1] sm:$0xff]
      %v219 = vlaneseq
      %v220 = vshrl.u32 %v219, 7
      %v221 = vsub.s32 0, %v220
      %v222 = vrot.slane %v217, %v221
      %v223 = vlaneseq
      %v224 = vshrl.u32 %v223, 7
      %v225 = vsub.s32 4, %v224
      %v226 = vrot.slane %v217, %v225
      %v229 = vlaneseq
      %v230 = vshrl.u32 %v229, 7
      %v231 = vsub.s32 0, %v230
      %v232 = vrot.slane %v222, %v231
      %v233 = vlaneseq
      %v234 = vshrl.u32 %v233, 7
      %v235 = vsub.s32 0, %v234
      %v236 = vrot.slane %v226, %v235
      %vm237 = vcmp.gt.f32.partialorder %v232, 0.5
      %vm238 = vcmp.gt.f32.partialorder %v236, 0.5
      %v239 = vlaneseq
      %v240 = vshrl.u32 %v239, 7
      %v241 = vsub.s32 1, %v240
      %v242 = vrot.slane %v217, %v241
      %v243 = vlaneseq
      %v244 = vshrl.u32 %v243, 7
      %v245 = vsub.s32 5, %v244
      %v246 = vrot.slane %v217, %v245
      %v249 = vlaneseq
      %v250 = vshrl.u32 %v249, 7
      %v251 = vsub.s32 1, %v250
      %v252 = vrot.slane %v242, %v251
      %v253 = vlaneseq
      %v254 = vshrl.u32 %v253, 7
      %v255 = vsub.s32 1, %v254
      %v256 = vrot.slane %v246, %v255
      %vm257 = vcmp.gt.f32.partialorder %v252, 0.5
      %vm258 = vcmp.gt.f32.partialorder %v256, 0.5
      %v259 = vlaneseq
      %v260 = vshrl.u32 %v259, 7
      %v261 = vsub.s32 2, %v260
      %v262 = vrot.slane %v217, %v261
      %v263 = vlaneseq
      %v264 = vshrl.u32 %v263, 7
      %v265 = vsub.s32 6, %v264
      %v266 = vrot.slane %v217, %v265
      %v269 = vlaneseq
      %v270 = vshrl.u32 %v269, 7
      %v271 = vsub.s32 2, %v270
      %v272 = vrot.slane %v262, %v271
      %v273 = vlaneseq
      %v274 = vshrl.u32 %v273, 7
      %v275 = vsub.s32 2, %v274
      %v276 = vrot.slane %v266, %v275
      %vm277 = vcmp.gt.f32.partialorder %v272, 0.5
      %vm278 = vcmp.gt.f32.partialorder %v276, 0.5
      %v279 = vlaneseq
      %v280 = vshrl.u32 %v279, 7
      %v281 = vsub.s32 3, %v280
      %v282 = vrot.slane %v217, %v281
      %v283 = vlaneseq
      %v284 = vshrl.u32 %v283, 7
      %v285 = vsub.s32 7, %v284
      %v286 = vrot.slane %v217, %v285
      %v289 = vlaneseq
      %v290 = vshrl.u32 %v289, 7
      %v291 = vsub.s32 3, %v290
      %v292 = vrot.slane %v282, %v291
      %v293 = vlaneseq
      %v294 = vshrl.u32 %v293, 7
      %v295 = vsub.s32 3, %v294
      %v296 = vrot.slane %v286, %v295
      %vm297 = vcmp.gt.f32.partialorder %v292, 0.5
      %vm298 = vcmp.gt.f32.partialorder %v296, 0.5
      %v300 = vcombine.high %v198, %v198
      %302 = vrot.lane.b32.xlu0 %v198, 1
      %v303 = vpop.permute.xlu0 %302
      %304 = vrot.lane.b32.xlu0 %v300, 1
      %v305 = vpop.permute.xlu0 %304
      %v306 = vlaneseq
      %v307 = vand.u32 %v306, 127
      %vm308 = vcmp.lt.s32.totalorder %v307, 1
      %v309 = vsel %vm308, %v303, %v305
      %v310 = vsel %vm308, %v305, %v303
      %311 = vrot.lane.b32.xlu0 %v198, 127
      %v312 = vpop.permute.xlu0 %311
      %313 = vrot.lane.b32.xlu0 %v300, 127
      %v314 = vpop.permute.xlu0 %313
      %vm315 = vcmp.lt.s32.totalorder %v307, 127
      %v316 = vsel %vm315, %v312, %v314
      %v317 = vsel %vm315, %v314, %v312
      %v318 = vsel %vm237, %v316, %v310
      %v319 = vsel %vm238, %v317, %v309
      %v320 = vsel %vm257, %v310, %v316
      %v321 = vsel %vm258, %v309, %v317
      %322 = vrot.lane.b32.xlu0 %v318, 16
      %v323 = vpop.permute.xlu0 %322
      %324 = vrot.lane.b32.xlu0 %v319, 16
      %v325 = vpop.permute.xlu0 %324
      %vm326 = vcmp.lt.s32.totalorder %v307, 16
      %v327 = vsel %vm326, %v323, %v325
      %v328 = vsel %vm326, %v325, %v323
      %329 = vrot.lane.b32.xlu0 %v318, 112
      %v330 = vpop.permute.xlu0 %329
      %331 = vrot.lane.b32.xlu0 %v319, 112
      %v332 = vpop.permute.xlu0 %331
      %vm333 = vcmp.lt.s32.totalorder %v307, 112
      %v334 = vsel %vm333, %v330, %v332
      %v335 = vsel %vm333, %v332, %v330
      %v336 = vsel %vm277, %v334, %v328
      %v337 = vsel %vm278, %v335, %v327
      %338 = vst [vmem:[#allocation2] sm:$0xf] %v336
      %339 = vst [vmem:[#allocation2 + $0x8] sm:$0xf] %v337
      %340 = vst [vmem:[#allocation2 + $0x30] sm:$0xf] %v318
      %341 = vst [vmem:[#allocation2 + $0x38] sm:$0xf] %v319
      %v342 = vsel %vm297, %v328, %v334
      %v343 = vsel %vm298, %v327, %v335
      %344 = vst [vmem:[#allocation2 + $0x60] sm:$0xf] %v342
      %345 = vst [vmem:[#allocation2 + $0x68] sm:$0xf] %v343
      %346 = vrot.lane.b32.xlu0 %v198, 16
      %v347 = vpop.permute.xlu0 %346
      %348 = vrot.lane.b32.xlu0 %v300, 16
      %v349 = vpop.permute.xlu0 %348
      %v350 = vsel %vm326, %v347, %v349
      %v351 = vsel %vm326, %v349, %v347
      %352 = vrot.lane.b32.xlu0 %v198, 112
      %v353 = vpop.permute.xlu0 %352
      %354 = vrot.lane.b32.xlu0 %v300, 112
      %v355 = vpop.permute.xlu0 %354
      %v356 = vsel %vm333, %v353, %v355
      %v357 = vsel %vm333, %v355, %v353
      %v358 = vsel %vm277, %v356, %v351
      %v359 = vsel %vm278, %v357, %v350
      %360 = vst [vmem:[#allocation2 + $0x10] sm:$0xf] %v358
      %361 = vst [vmem:[#allocation2 + $0x18] sm:$0xf] %v359
      %362 = vst [vmem:[#allocation2 + $0x40] sm:$0xf] %v198
      %363 = vst [vmem:[#allocation2 + $0x48] sm:$0xf] %v300
      %v364 = vsel %vm297, %v351, %v356
      %v365 = vsel %vm298, %v350, %v357
      %366 = vst [vmem:[#allocation2 + $0x70] sm:$0xf] %v364
      %367 = vst [vmem:[#allocation2 + $0x78] sm:$0xf] %v365
      %368 = vrot.lane.b32.xlu0 %v320, 16
      %v369 = vpop.permute.xlu0 %368
      %370 = vrot.lane.b32.xlu0 %v321, 16
      %v371 = vpop.permute.xlu0 %370
      %v372 = vsel %vm326, %v369, %v371
      %v373 = vsel %vm326, %v371, %v369
      %374 = vrot.lane.b32.xlu0 %v320, 112
      %v375 = vpop.permute.xlu0 %374
      %376 = vrot.lane.b32.xlu0 %v321, 112
      %v377 = vpop.permute.xlu0 %376
      %v378 = vsel %vm333, %v375, %v377
      %v379 = vsel %vm333, %v377, %v375
      %v380 = vsel %vm277, %v378, %v373
      %v381 = vsel %vm278, %v379, %v372
      %382 = vst [vmem:[#allocation2 + $0x20] sm:$0xf] %v380
      %383 = vst [vmem:[#allocation2 + $0x28] sm:$0xf] %v381
      %384 = vst [vmem:[#allocation2 + $0x50] sm:$0xf] %v320
      %385 = vst [vmem:[#allocation2 + $0x58] sm:$0xf] %v321
      %v386 = vsel %vm297, %v373, %v378
      %v387 = vsel %vm298, %v372, %v379
      %388 = vst [vmem:[#allocation2 + $0x80] sm:$0xf] %v386
      %389 = vst [vmem:[#allocation2 + $0x88] sm:$0xf] %v387
      %v390 = vld [vmem:[%s2] sm:$0xf]
      %v391 = vld [vmem:[#allocation2] sm:$0xff]
      %v392 = vld [vmem:[#allocation2 + $0x8] sm:$0xff]
      %v393 = vld [vmem:[#allocation2 + $0x10] sm:$0xff]
      %v394 = vld [vmem:[#allocation2 + $0x18] sm:$0xff]
      %v395 = vld [vmem:[#allocation2 + $0x20] sm:$0xff]
      %v396 = vld [vmem:[#allocation2 + $0x28] sm:$0xff]
      %v397 = vld [vmem:[#allocation2 + $0x30] sm:$0xff]
      %v398 = vld [vmem:[#allocation2 + $0x38] sm:$0xff]
      %v399 = vld [vmem:[#allocation2 + $0x40] sm:$0xff]
      %v400 = vld [vmem:[#allocation2 + $0x48] sm:$0xff]
      %v401 = vld [vmem:[#allocation2 + $0x50] sm:$0xff]
      %v402 = vld [vmem:[#allocation2 + $0x58] sm:$0xff]
      %v403 = vld [vmem:[#allocation2 + $0x60] sm:$0xff]
      %v404 = vld [vmem:[#allocation2 + $0x68] sm:$0xff]
      %v405 = vld [vmem:[#allocation2 + $0x70] sm:$0xff]
      %v406 = vld [vmem:[#allocation2 + $0x78] sm:$0xff]
      %v407 = vld [vmem:[#allocation2 + $0x80] sm:$0xff]
      %v408 = vld [vmem:[#allocation2 + $0x88] sm:$0xff]
      %vm409 = vcmask 588800
      %v411 = vsel %vm409, %v390, 0
      %413 = vmatprep.subr.mxu0 0.0
      %414 = vmatpush1.msra.mxu0 0.0
      %415 = vmatprep.subr.mxu0 0.0
      %416 = vmatpush1.msra.mxu0 0.0
      %417 = vmatprep.subr.mxu0 0.0
      %418 = vmatpush1.msra.mxu0 0.0
      %419 = vmatprep.subr.mxu0 0.0
      %420 = vmatpush1.msra.mxu0 0.0
      %421 = vmatprep.subr.mxu0 0.0
      %422 = vmatpush1.msra.mxu0 0.0
      %423 = vmatprep.subr.mxu0 0.0
      %424 = vmatpush1.msra.mxu0 0.0
      %425 = vmatprep.subr.mxu0 0.0
      %426 = vmatpush1.msra.mxu0 0.0
      %427 = vmatprep.subr.mxu0 %v408
      %428 = vmatpush1.msra.mxu0 %v407
      %429 = vmatprep.subr.mxu0 %v406
      %430 = vmatpush1.msra.mxu0 %v405
      %431 = vmatprep.subr.mxu0 %v404
      %432 = vmatpush1.msra.mxu0 %v403
      %433 = vmatprep.subr.mxu0 %v402
      %434 = vmatpush1.msra.mxu0 %v401
      %435 = vmatprep.subr.mxu0 %v400
      %436 = vmatpush1.msra.mxu0 %v399
      %437 = vmatprep.subr.mxu0 %v398
      %438 = vmatpush1.msra.mxu0 %v397
      %439 = vmatprep.subr.mxu0 %v396
      %440 = vmatpush1.msra.mxu0 %v395
      %441 = vmatprep.subr.mxu0 %v394
      %442 = vmatpush1.msra.mxu0 %v393
      %443 = vmatprep.subr.mxu0 %v392
      %444 = vmatpush1.msra.mxu0 %v391
      %445 = vmatprep.subr.mxu0 0.0
      %446 = vmatpush2.msra.mxu0 0.0
      %447 = vmatprep.subr.mxu0 0.0
      %448 = vmatpush2.msra.mxu0 0.0
      %449 = vmatprep.subr.mxu0 0.0
      %450 = vmatpush2.msra.mxu0 0.0
      %451 = vmatprep.subr.mxu0 0.0
      %452 = vmatpush2.msra.mxu0 0.0
      %453 = vmatprep.subr.mxu0 0.0
      %454 = vmatpush2.msra.mxu0 0.0
      %455 = vmatprep.subr.mxu0 0.0
      %456 = vmatpush2.msra.mxu0 0.0
      %457 = vmatprep.subr.mxu0 0.0
      %458 = vmatpush2.msra.mxu0 0.0
      %459 = vmatprep.subr.mxu0 0.0
      %460 = vmatpush2.msra.mxu0 0.0
      %461 = vmatprep.subr.mxu0 0.0
      %462 = vmatpush2.msra.mxu0 0.0
      %463 = vmatprep.subr.mxu0 0.0
      %464 = vmatpush2.msra.mxu0 0.0
      %465 = vmatprep.subr.mxu0 0.0
      %466 = vmatpush2.msra.mxu0 0.0
      %467 = vmatprep.subr.mxu0 0.0
      %468 = vmatpush2.msra.mxu0 0.0
      %469 = vmatprep.subr.mxu0 0.0
      %470 = vmatpush2.msra.mxu0 0.0
      %471 = vmatprep.subr.mxu0 0.0
      %472 = vmatpush2.msra.mxu0 0.0
      %473 = vmatprep.subr.mxu0 0.0
      %474 = vmatpush2.msra.mxu0 0.0
      %475 = vmatprep.subr.mxu0 0.0
      %476 = vmatpush2.msra.mxu0 0.0
      %477 = vmatprep.mubr.f32.mxu0 0.0
      %478 = vmatmul.mubr.f32.gmra.mxu0 %v411
      %v479 = vpop.f32.mrf.mxu0
      %v480 = vadd.f32 0.0, %v479
      %v481 = vpop.f32.mrf.mxu0
      %v482 = vadd.f32 0.0, %v481
      %483 = vdwg.mxu0
      %vm484 = vcmask 1043456
      %v485 = vsel %vm484, %v480, 0.0
      %v486 = vsel %vm484, %v482, 0.0
      %v487 = vadd.f32 %v485, %v486
      %488 = vadd.xlane.f32.xlu0 %v487
      %v489 = vpop.xlane.xlu0 %488
      %v490 = vmul.f32 %v489, 0.00390625
      %v491 = vsub.f32 %v480, %v490
      %v492 = vsub.f32 %v482, %v490
      %v493 = vmul.f32 %v491, %v491
      %v494 = vmul.f32 %v492, %v492
      %v495 = vsel %vm484, %v493, 0.0
      %v496 = vsel %vm484, %v494, 0.0
      %v497 = vadd.f32 %v495, %v496
      %498 = vadd.xlane.f32.xlu0 %v497
      %v499 = vpop.xlane.xlu0 %498
      %v500 = vmul.f32 %v499, 0.00390625
      %v501 = vadd.f32 %v500, 1e-05
      %v502 = vrsqrt.pop %v501
      %v503 = vmul.f32 %v491, %v502
      %v504 = vmul.f32 %v492, %v502
      %v505 = vmax.f32 %v503, 0.0
      %v506 = vmax.f32 %v504, 0.0
      %507 = vrot.lane.b32.xlu0 %v505, 1
      %v508 = vpop.permute.xlu0 %507
      %509 = vrot.lane.b32.xlu0 %v506, 1
      %v510 = vpop.permute.xlu0 %509
      %v511 = vsel %vm308, %v508, %v510
      %v512 = vsel %vm308, %v510, %v508
      %513 = vrot.lane.b32.xlu0 %v505, 127
      %v514 = vpop.permute.xlu0 %513
      %515 = vrot.lane.b32.xlu0 %v506, 127
      %v516 = vpop.permute.xlu0 %515
      %v517 = vsel %vm315, %v514, %v516
      %v518 = vsel %vm315, %v516, %v514
      %v519 = vsel %vm237, %v517, %v512
      %v520 = vsel %vm238, %v518, %v511
      %v521 = vsel %vm257, %v512, %v517
      %v522 = vsel %vm258, %v511, %v518
      %523 = vrot.lane.b32.xlu0 %v519, 16
      %v524 = vpop.permute.xlu0 %523
      %525 = vrot.lane.b32.xlu0 %v520, 16
      %v526 = vpop.permute.xlu0 %525
      %v527 = vsel %vm326, %v524, %v526
      %v528 = vsel %vm326, %v526, %v524
      %529 = vrot.lane.b32.xlu0 %v519, 112
      %v530 = vpop.permute.xlu0 %529
      %531 = vrot.lane.b32.xlu0 %v520, 112
      %v532 = vpop.permute.xlu0 %531
      %v533 = vsel %vm333, %v530, %v532
      %v534 = vsel %vm333, %v532, %v530
      %v535 = vsel %vm277, %v533, %v528
      %v536 = vsel %vm278, %v534, %v527
      %537 = vst [vmem:[#allocation2] sm:$0xf] %v535
      %538 = vst [vmem:[#allocation2 + $0x8] sm:$0xf] %v536
      %539 = vst [vmem:[#allocation2 + $0x30] sm:$0xf] %v519
      %540 = vst [vmem:[#allocation2 + $0x38] sm:$0xf] %v520
      %v541 = vsel %vm297, %v528, %v533
      %v542 = vsel %vm298, %v527, %v534
      %543 = vst [vmem:[#allocation2 + $0x60] sm:$0xf] %v541
      %544 = vst [vmem:[#allocation2 + $0x68] sm:$0xf] %v542
      %545 = vrot.lane.b32.xlu0 %v505, 16
      %v546 = vpop.permute.xlu0 %545
      %547 = vrot.lane.b32.xlu0 %v506, 16
      %v548 = vpop.permute.xlu0 %547
      %v549 = vsel %vm326, %v546, %v548
      %v550 = vsel %vm326, %v548, %v546
      %551 = vrot.lane.b32.xlu0 %v505, 112
      %v552 = vpop.permute.xlu0 %551
      %553 = vrot.lane.b32.xlu0 %v506, 112
      %v554 = vpop.permute.xlu0 %553
      %v555 = vsel %vm333, %v552, %v554
      %v556 = vsel %vm333, %v554, %v552
      %v557 = vsel %vm277, %v555, %v550
      %v558 = vsel %vm278, %v556, %v549
      %559 = vst [vmem:[#allocation2 + $0x10] sm:$0xf] %v557
      %560 = vst [vmem:[#allocation2 + $0x18] sm:$0xf] %v558
      %561 = vst [vmem:[#allocation2 + $0x40] sm:$0xf] %v505
      %562 = vst [vmem:[#allocation2 + $0x48] sm:$0xf] %v506
      %v563 = vsel %vm297, %v550, %v555
      %v564 = vsel %vm298, %v549, %v556
      %565 = vst [vmem:[#allocation2 + $0x70] sm:$0xf] %v563
      %566 = vst [vmem:[#allocation2 + $0x78] sm:$0xf] %v564
      %567 = vrot.lane.b32.xlu0 %v521, 16
      %v568 = vpop.permute.xlu0 %567
      %569 = vrot.lane.b32.xlu0 %v522, 16
      %v570 = vpop.permute.xlu0 %569
      %v571 = vsel %vm326, %v568, %v570
      %v572 = vsel %vm326, %v570, %v568
      %573 = vrot.lane.b32.xlu0 %v521, 112
      %v574 = vpop.permute.xlu0 %573
      %575 = vrot.lane.b32.xlu0 %v522, 112
      %v576 = vpop.permute.xlu0 %575
      %v577 = vsel %vm333, %v574, %v576
      %v578 = vsel %vm333, %v576, %v574
      %v579 = vsel %vm277, %v577, %v572
      %v580 = vsel %vm278, %v578, %v571
      %581 = vst [vmem:[#allocation2 + $0x20] sm:$0xf] %v579
      %582 = vst [vmem:[#allocation2 + $0x28] sm:$0xf] %v580
      %583 = vst [vmem:[#allocation2 + $0x50] sm:$0xf] %v521
      %584 = vst [vmem:[#allocation2 + $0x58] sm:$0xf] %v522
      %v585 = vsel %vm297, %v572, %v577
      %v586 = vsel %vm298, %v571, %v578
      %587 = vst [vmem:[#allocation2 + $0x80] sm:$0xf] %v585
      %588 = vst [vmem:[#allocation2 + $0x88] sm:$0xf] %v586
      %v589 = vld [vmem:[%s3] sm:$0xf]
      %v590 = vld [vmem:[#allocation2] sm:$0xff]
      %v591 = vld [vmem:[#allocation2 + $0x8] sm:$0xff]
      %v592 = vld [vmem:[#allocation2 + $0x10] sm:$0xff]
      %v593 = vld [vmem:[#allocation2 + $0x18] sm:$0xff]
      %v594 = vld [vmem:[#allocation2 + $0x20] sm:$0xff]
      %v595 = vld [vmem:[#allocation2 + $0x28] sm:$0xff]
      %v596 = vld [vmem:[#allocation2 + $0x30] sm:$0xff]
      %v597 = vld [vmem:[#allocation2 + $0x38] sm:$0xff]
      %v598 = vld [vmem:[#allocation2 + $0x40] sm:$0xff]
      %v599 = vld [vmem:[#allocation2 + $0x48] sm:$0xff]
      %v600 = vld [vmem:[#allocation2 + $0x50] sm:$0xff]
      %v601 = vld [vmem:[#allocation2 + $0x58] sm:$0xff]
      %v602 = vld [vmem:[#allocation2 + $0x60] sm:$0xff]
      %v603 = vld [vmem:[#allocation2 + $0x68] sm:$0xff]
      %v604 = vld [vmem:[#allocation2 + $0x70] sm:$0xff]
      %v605 = vld [vmem:[#allocation2 + $0x78] sm:$0xff]
      %v606 = vld [vmem:[#allocation2 + $0x80] sm:$0xff]
      %v607 = vld [vmem:[#allocation2 + $0x88] sm:$0xff]
      %v609 = vsel %vm409, %v589, 0
      %611 = vmatprep.subr.mxu0 0.0
      %612 = vmatpush1.msra.mxu0 0.0
      %613 = vmatprep.subr.mxu0 0.0
      %614 = vmatpush1.msra.mxu0 0.0
      %615 = vmatprep.subr.mxu0 0.0
      %616 = vmatpush1.msra.mxu0 0.0
      %617 = vmatprep.subr.mxu0 0.0
      %618 = vmatpush1.msra.mxu0 0.0
      %619 = vmatprep.subr.mxu0 0.0
      %620 = vmatpush1.msra.mxu0 0.0
      %621 = vmatprep.subr.mxu0 0.0
      %622 = vmatpush1.msra.mxu0 0.0
      %623 = vmatprep.subr.mxu0 0.0
      %624 = vmatpush1.msra.mxu0 0.0
      %625 = vmatprep.subr.mxu0 %v607
      %626 = vmatpush1.msra.mxu0 %v606
      %627 = vmatprep.subr.mxu0 %v605
      %628 = vmatpush1.msra.mxu0 %v604
      %629 = vmatprep.subr.mxu0 %v603
      %630 = vmatpush1.msra.mxu0 %v602
      %631 = vmatprep.subr.mxu0 %v601
      %632 = vmatpush1.msra.mxu0 %v600
      %633 = vmatprep.subr.mxu0 %v599
      %634 = vmatpush1.msra.mxu0 %v598
      %635 = vmatprep.subr.mxu0 %v597
      %636 = vmatpush1.msra.mxu0 %v596
      %637 = vmatprep.subr.mxu0 %v595
      %638 = vmatpush1.msra.mxu0 %v594
      %639 = vmatprep.subr.mxu0 %v593
      %640 = vmatpush1.msra.mxu0 %v592
      %641 = vmatprep.subr.mxu0 %v591
      %642 = vmatpush1.msra.mxu0 %v590
      %643 = vmatprep.subr.mxu0 0.0
      %644 = vmatpush2.msra.mxu0 0.0
      %645 = vmatprep.subr.mxu0 0.0
      %646 = vmatpush2.msra.mxu0 0.0
      %647 = vmatprep.subr.mxu0 0.0
      %648 = vmatpush2.msra.mxu0 0.0
      %649 = vmatprep.subr.mxu0 0.0
      %650 = vmatpush2.msra.mxu0 0.0
      %651 = vmatprep.subr.mxu0 0.0
      %652 = vmatpush2.msra.mxu0 0.0
      %653 = vmatprep.subr.mxu0 0.0
      %654 = vmatpush2.msra.mxu0 0.0
      %655 = vmatprep.subr.mxu0 0.0
      %656 = vmatpush2.msra.mxu0 0.0
      %657 = vmatprep.subr.mxu0 0.0
      %658 = vmatpush2.msra.mxu0 0.0
      %659 = vmatprep.subr.mxu0 0.0
      %660 = vmatpush2.msra.mxu0 0.0
      %661 = vmatprep.subr.mxu0 0.0
      %662 = vmatpush2.msra.mxu0 0.0
      %663 = vmatprep.subr.mxu0 0.0
      %664 = vmatpush2.msra.mxu0 0.0
      %665 = vmatprep.subr.mxu0 0.0
      %666 = vmatpush2.msra.mxu0 0.0
      %667 = vmatprep.subr.mxu0 0.0
      %668 = vmatpush2.msra.mxu0 0.0
      %669 = vmatprep.subr.mxu0 0.0
      %670 = vmatpush2.msra.mxu0 0.0
      %671 = vmatprep.subr.mxu0 0.0
      %672 = vmatpush2.msra.mxu0 0.0
      %673 = vmatprep.subr.mxu0 0.0
      %674 = vmatpush2.msra.mxu0 0.0
      %675 = vmatprep.mubr.f32.mxu0 0.0
      %676 = vmatmul.mubr.f32.gmra.mxu0 %v609
      %v677 = vpop.f32.mrf.mxu0
      %v678 = vadd.f32 0.0, %v677
      %v679 = vpop.f32.mrf.mxu0
      %v680 = vadd.f32 0.0, %v679
      %681 = vdwg.mxu0
      %v682 = vsel %vm484, %v678, 0.0
      %v683 = vsel %vm484, %v680, 0.0
      %v684 = vadd.f32 %v682, %v683
      %685 = vadd.xlane.f32.xlu0 %v684
      %v686 = vpop.xlane.xlu0 %685
      %v687 = vmul.f32 %v686, 0.00390625
      %v688 = vsub.f32 %v678, %v687
      %v689 = vsub.f32 %v680, %v687
      %v690 = vmul.f32 %v688, %v688
      %v691 = vmul.f32 %v689, %v689
      %v692 = vsel %vm484, %v690, 0.0
      %v693 = vsel %vm484, %v691, 0.0
      %v694 = vadd.f32 %v692, %v693
      %695 = vadd.xlane.f32.xlu0 %v694
      %v696 = vpop.xlane.xlu0 %695
      %v697 = vmul.f32 %v696, 0.00390625
      %v698 = vadd.f32 %v697, 1e-05
      %v699 = vrsqrt.pop %v698
      %v700 = vmul.f32 %v688, %v699
      %v701 = vmul.f32 %v689, %v699
      %v704 = vcombine.low %v700, %v701
      %v706 = vadd.f32 %v198, %v704
      %707 = vst [vmem:[%s197] sm:$0xff] %v706
      %p708 = scmp.lt.s32.totalorder %s15, 1
      %s709 = scalar_select %p708, %s15, 1
      %s710 = smul.addr %s709, 2
      %s711 = smul.addr %s710, 4
      %s712 = scalar_lea.vmem %s4, %s711
      // Predicated region
      $region37: #{res_block.1} parent=35 // pred_check
        %p713 = pneg %p122
      $region38: #{res_block.1} parent=35 // pred_check_branch
        %715 = sbr.rel (%p713) target = $region40
      $region39: #{res_block.1} parent=35 // pred_region
        _
      $region40: #{res_block.1} parent=35 // pred_fallthru
        _
    $region36: #{res_block.1} parent=5 // pred_fallthru
      _
    %p716 = scmp.le.s32.totalorder 2, %s10
    // Predicated region
    $region41: #{res_block.1} parent=5 // pred_check
      %p717 = pneg %p716
    $region42: #{res_block.1} parent=5 // pred_check_branch
      %719 = sbr.rel (%p717) target = $region44
    $region43: #{res_block.1} parent=5 // pred_region
      %s720 = ssub.s32 %s10, 2
      // Predicated region
      $region45: #{res_block.1} parent=43 // pred_check
        %p721 = pneg %p128
      $region46: #{res_block.1} parent=43 // pred_check_branch
        %723 = sbr.rel (%p721) target = $region48
      $region47: #{res_block.1} parent=43 // pred_region
        %p724 = scmp.lt.s32.totalorder %s16, 1
        %s725 = scalar_select %p724, %s16, 1
        %s726 = smul.addr %s725, 2
        %s727 = smul.addr %s726, 4
        %s728 = scalar_lea.vmem %s4, %s727
      $region48: #{res_block.1} parent=43 // pred_fallthru
        _
    $region44: #{res_block.1} parent=5 // pred_fallthru
      _
  $region6: #{res_block.1} parent=0 // loop_footer
    %s14 = sadd.s32 1, %s10
  $region7: #{res_block.1} parent=0 // loop_footer_branch
    %9 = sbr.rel target = $region3
  $region8: #{res_block.1} parent=0 // loop_exit
    _

</llo_original>
